<compile_context>
chip_gen: v6e
topology: v6e:2x2x1
jax: 0.10.0
libtpu: 0.0.40
codegen_flags: <defaults>
</compile_context>

<pallas_src>
import functools
import math

import jax
import jax.numpy as jnp
from jax.experimental import pallas as pl
from jax.experimental.pallas import tpu as pltpu

_LANES = 128
_SUBLANES = 8
_VREG_ELEMS = _SUBLANES * _LANES            # 1024
_BLOCK_BYTES = 2 * 1024 * 1024              # ~2 MiB blocks: ~85% of HBM roofline,
                                            # 4 buffers * 2 MiB = 8 MiB VMEM ->
                                            # fits default scoped VMEM everywhere.


def _amp_to_db_kernel(x_ref, o_ref, *, c1, c2, amin):
    # Elementwise: 10*(log10(max(x^2, amin)) - log10(ref)) == c1*ln(p) + c2.
    # Upcast to f32 (free: kernel is DMA-bound; also full accuracy for bf16).
    x = x_ref[...].astype(jnp.float32)
    # Clamp BEFORE the transcendental: matches torch.clamp(min=amin) and makes
    # garbage reads in masked boundary blocks harmless (OOB writes discarded).
    p = jnp.maximum(x * x, jnp.float32(amin))
    o_ref[...] = (jnp.float32(c1) * jnp.log(p) + jnp.float32(c2)).astype(o_ref.dtype)


def _tensorcores_per_chip():
    # v7x has 2 TensorCores per chip; v5e / v6e have 1.
    try:
        kind = jax.devices()[0].device_kind.lower()
    except Exception:
        return 1
    return 2 if "v7" in kind else 1


def amplitude_to_db(x, ref=1.0, amin=1e-07):
    assert ref > amin, (
        "Reference value is expected to be bigger than amin, but I have"
        f"ref:{ref} and amin:{amin}"
    )
    orig_shape = x.shape
    orig_dtype = x.dtype
    itemsize = jnp.dtype(orig_dtype).itemsize
    n = int(x.size)
    if n == 0:
        return x

    c1 = 10.0 / math.log(10.0)          # 10*log10(p) = c1 * ln(p)
    c2 = -10.0 * math.log10(ref)
    # ref/amin are fixed per module instance -> baking them into the closure is
    # fine (one compile per (ref, amin, shape, dtype)).
    kernel = functools.partial(_amp_to_db_kernel, c1=c1, c2=c2, amin=amin)

    cores = _tensorcores_per_chip()
    min_steps = 2 * cores               # >=2 blocks per TC for DMA overlap

    block_elems = max(_VREG_ELEMS, _BLOCK_BYTES // itemsize)

    cost = pl.CostEstimate(
        flops=3 * n, transcendentals=n, bytes_accessed=2 * n * itemsize
    )
    # TODO(synk): on v7x, confirm via trace that the "parallel" axis is sharded
    # across both TensorCores; if not, switch this axis to pltpu.CORE_PARALLEL.
    cparams = pltpu.CompilerParams(dimension_semantics=("parallel",))

    flat = x.reshape(-1)

    if n % _LANES == 0:
        # Common path (typical spectrogram sizes): zero-copy reshape to a
        # lane-dense (rows, 128) slab.  No pad copy, no output slice.
        rows = n // _LANES
        x2d = flat.reshape(rows, _LANES)
        max_rows = block_elems // _LANES
        if rows <= _SUBLANES:
            tr = rows                                   # full-dim block
        else:
            tr = min(max_rows, rows)
            if rows > min_steps * _SUBLANES:
                tr = min(tr, pl.cdiv(rows, min_steps))  # feed all TCs
            tr = max(_SUBLANES, (tr // _SUBLANES) * _SUBLANES)
        grid = (pl.cdiv(rows, tr),)
        out2d = pl.pallas_call(
            kernel,
            out_shape=jax.ShapeDtypeStruct((rows, _LANES), orig_dtype),
            grid_spec=pltpu.PrefetchScalarGridSpec(
                num_scalar_prefetch=0,
                grid=grid,
                in_specs=[pl.BlockSpec((tr, _LANES), lambda i: (i, 0))],
                out_specs=pl.BlockSpec((tr, _LANES), lambda i: (i, 0)),
            ),
            compiler_params=cparams,
            cost_estimate=cost,
        )(x2d)
        return out2d.reshape(orig_shape)

    # Lane-misaligned sizes: run directly on the unpadded 1-D flat array with
    # a cdiv grid.  The boundary block is masked by Pallas (garbage reads are
    # neutralized by the pre-log clamp; OOB writes are discarded), so there is
    # no pad copy and no output slice -> zero extra HBM passes.
    if n <= block_elems:
        blk = n                                        # full-dim block
    else:
        blk = block_elems
        if n > min_steps * _VREG_ELEMS:
            blk = min(blk, pl.cdiv(n, min_steps))
        blk = max(_VREG_ELEMS, (blk // _VREG_ELEMS) * _VREG_ELEMS)
    grid = (pl.cdiv(n, blk),)
    out1d = pl.pallas_call(
        kernel,
        out_shape=jax.ShapeDtypeStruct((n,), orig_dtype),
        grid_spec=pltpu.PrefetchScalarGridSpec(
            num_scalar_prefetch=0,
            grid=grid,
            in_specs=[pl.BlockSpec((blk,), lambda i: (i,))],
            out_specs=pl.BlockSpec((blk,), lambda i: (i,)),
        ),
        compiler_params=cparams,
        cost_estimate=cost,
    )(flat)
    return out1d.reshape(orig_shape)


class AmplitudeToDb:
    """JAX/Pallas port of the PyTorch AmplitudeToDb module (no parameters)."""

    def __init__(self, ref=1.0, amin=1e-07):
        assert ref > amin, (
            "Reference value is expected to be bigger than amin, but I have"
            f"ref:{ref} and amin:{amin}"
        )
        self.ref = ref
        self.amin = amin

    def __call__(self, x):
        return amplitude_to_db(x, ref=self.ref, amin=self.amin)

    def __repr__(self):
        return f"AmplitudeToDb(ref={self.ref}, amin={self.amin})"


if __name__ == "__main__":
    key = jax.random.PRNGKey(0)
    mod = AmplitudeToDb(ref=1.0, amin=1e-07)

    # Amplitude-spectrogram-like input: (batch=2, channels=4, 16, 16) f32,
    # 128-aligned -> 2-D lane-dense path.
    x = jax.random.uniform(
        key, (2, 4, 16, 16), dtype=jnp.float32, minval=0.0, maxval=2.0
    )
    y = jax.block_until_ready(mod(x))
    p = jnp.maximum(x * x, 1e-07)
    y_ref = 10.0 * (jnp.log10(p) - jnp.log10(jnp.float32(1.0)))
    assert y.shape == x.shape and y.dtype == x.dtype
    assert jnp.allclose(y, y_ref, atol=1e-4, rtol=1e-4)

    # Lane-misaligned size -> unpadded 1-D path (no concat/slice HBM passes).
    x2 = jax.random.uniform(key, (3, 5, 7), dtype=jnp.float32, minval=0.0,
                            maxval=2.0)
    y2 = jax.block_until_ready(mod(x2))
    y2_ref = 10.0 * jnp.log10(jnp.maximum(x2 * x2, 1e-07))
    assert y2.shape == x2.shape and jnp.allclose(y2, y2_ref, atol=1e-4, rtol=1e-4)

    # bf16 input: math runs in f32 inside the kernel, output cast back to bf16.
    x3 = jax.random.uniform(key, (2, 4, 8, 16), dtype=jnp.float32,
                            minval=0.05, maxval=2.0).astype(jnp.bfloat16)
    y3 = jax.block_until_ready(mod(x3))
    x3f = x3.astype(jnp.float32)
    y3_ref = 10.0 * jnp.log10(jnp.maximum(x3f * x3f, 1e-07))
    assert y3.dtype == jnp.bfloat16
    assert jnp.allclose(y3.astype(jnp.float32), y3_ref, atol=0.5, rtol=2e-2)

    print("KERNEL_OK")
</pallas_src>

<mosaic_0001>
module attributes {stable_mosaic.version = 11 : i64} {
  func.func @_amp_to_db_kernel(%arg0: i32, %arg1: memref<16x128xf32, #tpu.memory_space<vmem>>, %arg2: memref<16x128xf32, #tpu.memory_space<vmem>>) attributes {dimension_semantics = [#tpu.dimension_semantics<parallel>], iteration_bounds = array<i64: 1>, scalar_prefetch = 0 : i64, scratch_operands = 0 : i64, tpu.core_type = #tpu.core_type<tc>, window_params = [{transform_indices = @transform_0, window_bounds = array<i64: 16, 128>}, {transform_indices = @transform_1, window_bounds = array<i64: 16, 128>}]} {
    %c0 = arith.constant 0 : index
    %c0_0 = arith.constant 0 : index
    %0 = vector.load %arg1[%c0, %c0_0] : memref<16x128xf32, #tpu.memory_space<vmem>>, vector<16x128xf32>
    %1 = arith.mulf %0, %0 : vector<16x128xf32>
    %cst = arith.constant 1.000000e-07 : f32
    %2 = vector.broadcast %cst : f32 to vector<16x128xf32>
    %3 = arith.maximumf %1, %2 : vector<16x128xf32>
    %4 = math.log %3 : vector<16x128xf32>
    %cst_1 = arith.constant 4.34294462 : f32
    %5 = vector.broadcast %cst_1 : f32 to vector<16x128xf32>
    %6 = arith.mulf %5, %4 : vector<16x128xf32>
    %cst_2 = arith.constant -0.000000e+00 : f32
    %7 = vector.broadcast %cst_2 : f32 to vector<16x128xf32>
    %8 = arith.addf %6, %7 : vector<16x128xf32>
    %c0_3 = arith.constant 0 : index
    %c0_4 = arith.constant 0 : index
    %9 = vector.load %arg2[%c0_3, %c0_4] : memref<16x128xf32, #tpu.memory_space<vmem>>, vector<16x128xf32>
    tpu.vector_store %arg2[%c0_3, %c0_4], %8 {strides = array<i32>} : memref<16x128xf32, #tpu.memory_space<vmem>>, vector<16x128xf32>,
    return
  }
  func.func @transform_0(%arg0: i32) -> (i32, i32) {
    %c0_i32 = arith.constant 0 : i32
    %c0_i32_0 = arith.constant 0 : i32
    return %arg0, %c0_i32 : i32, i32
  }
  func.func @transform_1(%arg0: i32) -> (i32, i32) {
    %c0_i32 = arith.constant 0 : i32
    %c0_i32_0 = arith.constant 0 : i32
    return %arg0, %c0_i32 : i32, i32
  }
}

</mosaic_0001>

<llo_original>
// kernel: tpu_custom_call.1
$region0: #{tpu_custom_call.1}
  #allocation0 [shape = 'u32[]', space=smem, size = 0x4, offset = 0x4, fixed_abs, tag = 'smem constant byte address 0x4 - core index']
  #allocation1 [shape = 'u32[144,128]{1,0:T(1,128)}', space=vmem, size = 0x12000, scoped, tag = 'internal scratch']
  %s0 = inlined_call_operand.hbm [shape: f32[16,128], index: 0, kind: input, shape index: {}]
  %s1 = inlined_call_operand.hbm [shape: f32[16,128], index: 1, kind: output, shape index: {}]
  %s2 = sld [smem:[#allocation0]]
  $region18: #{tpu_custom_call.1} parent=0
    _
  %s4 = ssub.s32 1, %s2
  %s5 = scalar_select 0, %s4, %s2
  $region1: #{tpu_custom_call.1} parent=0
    #allocation2 [shape = 'u8[8192]{0}', space=vmem, size = 0x2000, scoped, tag = 'input window, operand 0, single buffered']
    #allocation3 [shape = 's32[1]{0}', space=sflag, size = 0x4, scoped, tag = 'scoped memory for tpu_custom_call.1']
    #allocation4 [shape = 's32[1]{0}', space=sflag, size = 0x4, scoped, tag = 'scoped memory for tpu_custom_call.1']
    #allocation5 [shape = 'u8[8192]{0}', space=vmem, size = 0x2000, scoped, tag = 'output window, operand 0, single buffered']
    %6 = vsyncpa [#allocation3], 0
    %7 = vsyncpa [#allocation4], 0
    // Predicated region
    $region2: #{tpu_custom_call.1} parent=1 // pred_check
      _
    $region3: #{tpu_custom_call.1} parent=1 // pred_check_branch
      %9 = sbr.rel (0) target = $region5
    $region4: #{tpu_custom_call.1} parent=1 // pred_region
      %s11 = ssub.s32 256, 256
      %12 = vsyncadd [#allocation3], %s11
      %s13 = sshll.u32 [#allocation2], 4
      %s14 = int_to_ptr.vmem [resolvable:$true] %s13
      %19 = dma.hbm_to_vmem [thread:$0]  %s0, 256, %s14, [#allocation3], 128, 128, 8
    $region5: #{tpu_custom_call.1} parent=1 // pred_fallthru
      _
    // Predicated region
    $region6: #{tpu_custom_call.1} parent=1 // pred_check
      _
    $region7: #{tpu_custom_call.1} parent=1 // pred_check_branch
      %21 = sbr.rel (0) target = $region9
    $region8: #{tpu_custom_call.1} parent=1 // pred_region
      %22 = dma.done [#allocation3], 256
    $region9: #{tpu_custom_call.1} parent=1 // pred_fallthru
      _
    %v23 = vld [vmem:[#allocation2] sm:$0xff]
    %v24 = vld [vmem:[#allocation2 + $0x8] sm:$0xff]
    %v25 = vmul.f32 %v23, %v23
    %v26 = vmul.f32 %v24, %v24
    %v27 = vmax.f32 %v25, 1e-07
    %v28 = vmax.f32 %v26, 1e-07
    %v29 = vlog2.pop %v27
    %v30 = vmul.f32 %v29, 0.6931472
    %v31 = vlog2.pop %v28
    %v32 = vmul.f32 %v31, 0.6931472
    %v33 = vmul.f32 %v30, 4.3429446
    %v34 = vmul.f32 %v32, 4.3429446
    %35 = vst [vmem:[#allocation5] sm:$0xff] %v33
    %36 = vst [vmem:[#allocation5 + $0x8] sm:$0xff] %v34
    // Predicated region
    $region10: #{tpu_custom_call.1} parent=1 // pred_check
      _
    $region11: #{tpu_custom_call.1} parent=1 // pred_check_branch
      %38 = sbr.rel (0) target = $region13
    $region12: #{tpu_custom_call.1} parent=1 // pred_region
      %s40 = ssub.s32 256, 256
      %41 = vsyncadd [#allocation4], %s40
      %s42 = sshll.u32 [#allocation5], 4
      %s43 = int_to_ptr.vmem [resolvable:$true] %s42
      %48 = dma.vmem_to_hbm [thread:$0]  %s43, 256, %s1, [#allocation4], 128, 128, 8
    $region13: #{tpu_custom_call.1} parent=1 // pred_fallthru
      _
    // Predicated region
    $region14: #{tpu_custom_call.1} parent=1 // pred_check
      _
    $region15: #{tpu_custom_call.1} parent=1 // pred_check_branch
      %50 = sbr.rel (0) target = $region17
    $region16: #{tpu_custom_call.1} parent=1 // pred_region
      %51 = dma.done [#allocation4], 256
    $region17: #{tpu_custom_call.1} parent=1 // pred_fallthru
      _
    %52 = vsyncpa [#allocation3], 1
    %53 = vsyncpa [#allocation4], 1

</llo_original>
